<compile_context>
chip_gen: v6e
topology: v6e:2x2x1
jax: 0.10.0
libtpu: 0.0.40
codegen_flags: <defaults>
</compile_context>

<pallas_src>
import functools

import jax
import jax.numpy as jnp
from jax import lax
from jax.experimental import pallas as pl
from jax.experimental.pallas import tpu as pltpu

BN_EPS = 1e-5

# Conservative scoped-VMEM limit, safe on every generation
# (v5e/v6e: 128 MiB physical, v7x: 64 MiB physical).
VMEM_LIMIT_BYTES = 48 * 1024 * 1024
# Budget gate for the fully VMEM-resident fused path (leave headroom on v7x).
FUSED_VMEM_BUDGET = 40 * 1024 * 1024


# ---------------------------------------------------------------------------
# Fused single-call path: whole ConvBlock in one kernel, one tile (TM == Mp).
# ---------------------------------------------------------------------------
def fused_convblock_kernel(w_ref, x_ref, bias_ref, o_ref, *,
                           n_batch, hw, m_valid, m_padded):
    """conv (fat im2col matmul) + global BN stats + scale/shift + ReLU.

    w_ref:    (Cout, CKK)    bf16 folded conv weights
    x_ref:    (CKK,  Mp)     bf16 im2col columns, pixels on lanes
    bias_ref: (Cout, 1)      f32 BN beta (gamma == 1)
    o_ref:    (N, Cout, HW)  output; NCHW-contiguous once reshaped outside
    """
    conv = jnp.dot(w_ref[...], x_ref[...],
                   preferred_element_type=jnp.float32)           # (Cout, Mp) f32
    # Padded (all-zero) im2col columns give conv == 0, so the raw sum over Mp
    # columns equals the sum over the M valid pixels.
    mean = jnp.sum(conv, axis=1, keepdims=True) / m_valid        # (Cout, 1)
    centered = conv - mean
    # Numerically stable centered variance; every padded column contributes
    # exactly mean^2 to the centered sum of squares -> subtract it out.
    ssq = jnp.sum(centered * centered, axis=1, keepdims=True)
    ssq = ssq - (m_padded - m_valid) * mean * mean
    var = jnp.maximum(ssq, 0.0) / m_valid
    inv_std = lax.rsqrt(var + BN_EPS)
    y = jnp.maximum(centered * inv_std + bias_ref[...], 0.0)     # BN + ReLU
    # Lane-aligned per-image stores -> (N, Cout, H*W), i.e. NCHW after reshape.
    for n in range(n_batch):
        o_ref[n, :, :] = y[:, n * hw:(n + 1) * hw].astype(o_ref.dtype)


# ---------------------------------------------------------------------------
# Two-pass fallback kernels (production sizes, not VMEM-resident).
# ---------------------------------------------------------------------------
def conv_stats_kernel(w_ref, x_ref, conv_ref, sum_ref, sumsq_ref):
    """Pass 1: conv tile (fat matmul) + fused per-channel partial sums."""
    conv = jnp.dot(w_ref[...], x_ref[...], preferred_element_type=jnp.float32)
    conv_ref[...] = conv
    sum_ref[...] = jnp.sum(conv, axis=1, keepdims=True)[None]
    sumsq_ref[...] = jnp.sum(conv * conv, axis=1, keepdims=True)[None]


def bn_relu_kernel(scale_ref, shift_ref, conv_ref, o_ref):
    """Pass 2: y = relu(conv * scale + shift); fully lane-dense."""
    y = conv_ref[...] * scale_ref[...] + shift_ref[...]
    o_ref[...] = jnp.maximum(y, 0.0).astype(o_ref.dtype)


# ---------------------------------------------------------------------------
# Wrapper glue.
# ---------------------------------------------------------------------------
def _im2col(x_nchw, kernel_size, m_padded):
    """(N,Cin,H,W) -> bf16 (Cin*K*K, Mp); pixels (N,H,W order) on the fast axis."""
    N, Cin, H, W = x_nchw.shape
    K = kernel_size
    pad = K // 2
    M = N * H * W
    x_nhwc = jnp.transpose(x_nchw, (0, 2, 3, 1)).astype(jnp.float32)
    x_pad = jnp.pad(x_nhwc, ((0, 0), (pad, pad), (pad, pad), (0, 0)))
    taps = [x_pad[:, kh:kh + H, kw:kw + W, :]
            for kh in range(K) for kw in range(K)]            # each (N, H, W, Cin)
    patches = jnp.stack(taps, axis=0)                         # (K*K, N, H, W, Cin)
    x_colT = jnp.transpose(patches, (4, 0, 1, 2, 3)).reshape(Cin * K * K, M)
    if m_padded != M:
        x_colT = jnp.pad(x_colT, ((0, 0), (0, m_padded - M)))  # zero cols -> 0 conv
    return x_colT.astype(jnp.bfloat16)


def conv_block_forward(x_nchw, weight_oihw, bias, kernel_size, *,
                       tile_m=512, force_two_pass=False):
    """NCHW in / NCHW out, matching PyTorch ConvBlock.forward (training BN)."""
    N, Cin, H, W = x_nchw.shape
    Cout = weight_oihw.shape[0]
    K = kernel_size
    CKK = Cin * K * K
    HW = H * W
    M = N * HW

    w2d = weight_oihw.reshape(Cout, CKK).astype(jnp.bfloat16)
    bias2d = bias.reshape(Cout, 1).astype(jnp.float32)

    # -------- fused single-call path (whole problem resident in VMEM) --------
    Mp1 = pl.cdiv(M, 128) * 128
    fused_bytes = (CKK * Mp1 * 2 + Cout * CKK * 2          # bf16 inputs
                   + 3 * Cout * Mp1 * 4                    # conv/centered/y (f32)
                   + N * Cout * HW * x_nchw.dtype.itemsize)
    if (not force_two_pass) and fused_bytes <= FUSED_VMEM_BUDGET:
        x_colT = _im2col(x_nchw, K, Mp1)
        kernel = functools.partial(fused_convblock_kernel,
                                   n_batch=N, hw=HW, m_valid=M, m_padded=Mp1)
        out = pl.pallas_call(
            kernel,
            out_shape=jax.ShapeDtypeStruct((N, Cout, HW), x_nchw.dtype),
            grid=(1,),
            in_specs=[
                pl.BlockSpec((Cout, CKK), lambda i: (0, 0)),
                pl.BlockSpec((CKK, Mp1), lambda i: (0, 0)),
                pl.BlockSpec((Cout, 1), lambda i: (0, 0)),
            ],
            out_specs=pl.BlockSpec((N, Cout, HW), lambda i: (0, 0, 0)),
            compiler_params=pltpu.CompilerParams(
                dimension_semantics=("arbitrary",),
                vmem_limit_bytes=VMEM_LIMIT_BYTES),
        )(w2d, x_colT, bias2d)
        return out.reshape(N, Cout, H, W)       # free reshape: already NCHW order

    # -------- two-pass fallback (production sizes) ---------------------------
    TM = tile_m                                 # 512: 256-aligned (v6e/v7x MXU),
    Mp = pl.cdiv(M, TM) * TM                    # 128-aligned (v5e), big lane tiles
    num_tiles = Mp // TM
    x_colT = _im2col(x_nchw, K, Mp)

    cparams = pltpu.CompilerParams(
        dimension_semantics=("parallel",),      # megacore-shardable on v7x
        vmem_limit_bytes=VMEM_LIMIT_BYTES)

    # Pass 1: conv tiles + per-tile per-channel sum / sumsq partials.
    conv_out, tile_sum, tile_sumsq = pl.pallas_call(
        conv_stats_kernel,
        out_shape=(
            jax.ShapeDtypeStruct((Cout, Mp), jnp.float32),
            jax.ShapeDtypeStruct((num_tiles, Cout, 1), jnp.float32),
            jax.ShapeDtypeStruct((num_tiles, Cout, 1), jnp.float32),
        ),
        grid=(num_tiles,),
        in_specs=[
            pl.BlockSpec((Cout, CKK), lambda i: (0, 0)),
            pl.BlockSpec((CKK, TM), lambda i: (0, i)),
        ],
        out_specs=(
            pl.BlockSpec((Cout, TM), lambda i: (0, i)),
            pl.BlockSpec((1, Cout, 1), lambda i: (i, 0, 0)),
            pl.BlockSpec((1, Cout, 1), lambda i: (i, 0, 0)),
        ),
        compiler_params=cparams,
    )(w2d, x_colT)

    # Tiny (Cout-sized) global reduction + BN affine folding in plain JAX.
    s1 = jnp.sum(tile_sum[:, :, 0], axis=0)
    s2 = jnp.sum(tile_sumsq[:, :, 0], axis=0)
    mean = s1 / M
    var = jnp.maximum(s2 / M - mean * mean, 0.0)        # biased variance
    inv_std = lax.rsqrt(var + BN_EPS)
    scale = inv_std.reshape(Cout, 1)                    # gamma == 1
    shift = (bias.astype(jnp.float32) - mean * inv_std).reshape(Cout, 1)

    # Pass 2: normalize + bias + ReLU; overwrite the conv buffer when possible.
    aliases = {2: 0} if x_nchw.dtype == jnp.float32 else {}
    out_cm = pl.pallas_call(
        bn_relu_kernel,
        out_shape=jax.ShapeDtypeStruct((Cout, Mp), x_nchw.dtype),
        grid=(num_tiles,),
        in_specs=[
            pl.BlockSpec((Cout, 1), lambda i: (0, 0)),
            pl.BlockSpec((Cout, 1), lambda i: (0, 0)),
            pl.BlockSpec((Cout, TM), lambda i: (0, i)),
        ],
        out_specs=pl.BlockSpec((Cout, TM), lambda i: (0, i)),
        compiler_params=cparams,
        input_output_aliases=aliases,
    )(scale, shift, conv_out)

    # TODO(synk): fold this slice/reshape/transpose into pass 2 by gridding over
    # (N, pixel-tiles within an image) and writing NCHW-contiguous blocks.
    out = out_cm[:, :M].reshape(Cout, N, H, W)
    return jnp.transpose(out, (1, 0, 2, 3))             # -> NCHW


def ref_forward(x_nchw, weight_oihw, bias, kernel_size, *,
                operand_dtype=jnp.float32):
    """Pure-JAX reference of ConvBlock.forward (training-mode BN, gamma=1).

    operand_dtype=jnp.bfloat16 gives a precision-matched reference for the
    kernel's bf16 MXU operands (accumulation stays f32).
    """
    pad = kernel_size // 2
    xq = x_nchw.astype(operand_dtype).astype(jnp.float32)
    wq = weight_oihw.astype(operand_dtype).astype(jnp.float32)
    conv = lax.conv_general_dilated(
        xq, wq, window_strides=(1, 1), padding=[(pad, pad), (pad, pad)],
        dimension_numbers=("NCHW", "OIHW", "NCHW"),
        precision=lax.Precision.HIGHEST)
    mean = jnp.mean(conv, axis=(0, 2, 3), keepdims=True)
    var = jnp.var(conv, axis=(0, 2, 3), keepdims=True)
    out = (conv - mean) * lax.rsqrt(var + BN_EPS) + bias.reshape(1, -1, 1, 1)
    return jnp.maximum(out, 0.0)


if __name__ == "__main__":
    # ConvBlock(kernel_size=3, input_channels=4, output_channels=8) on
    # x of shape (2, 4, 16, 16).
    key = jax.random.PRNGKey(0)
    k_x, k_w, k_b = jax.random.split(key, 3)

    N, Cin, H, W = 2, 4, 16, 16
    Cout, K = 8, 3

    x = jax.random.normal(k_x, (N, Cin, H, W), dtype=jnp.float32)
    fan_in = Cin * K * K
    weight = jax.random.uniform(k_w, (Cout, Cin, K, K), dtype=jnp.float32,
                                minval=-1.0, maxval=1.0) / jnp.sqrt(fan_in)
    bias = jax.random.normal(k_b, (Cout,), dtype=jnp.float32) * 0.1

    # Primary path: fused, fully VMEM-resident single pallas_call.
    fwd = jax.jit(functools.partial(conv_block_forward, kernel_size=K))
    out = jax.block_until_ready(fwd(x, weight, bias))
    assert out.shape == (N, Cout, H, W)

    # Also exercise the two-pass fallback (what larger problems take).
    fwd2 = jax.jit(functools.partial(conv_block_forward, kernel_size=K,
                                     force_two_pass=True))
    out2 = jax.block_until_ready(fwd2(x, weight, bias))
    assert out2.shape == (N, Cout, H, W)

    ref_f32 = ref_forward(x, weight, bias, K)                         # full f32
    ref_mixed = ref_forward(x, weight, bias, K, operand_dtype=jnp.bfloat16)

    for o in (out, out2):
        # Tight check vs the precision-matched reference (same bf16 operands).
        err_m = float(jnp.max(jnp.abs(o - ref_mixed)))
        assert jnp.allclose(o, ref_mixed, atol=2e-3, rtol=2e-3), err_m
        # Loose check vs the pure-f32 reference; slack is solely the bf16
        # rounding of the MXU operands (per the review's bf16 recommendation).
        err_f = float(jnp.max(jnp.abs(o - ref_f32)))
        assert jnp.allclose(o, ref_f32, atol=5e-2, rtol=5e-2), err_f

    print("KERNEL_OK")
</pallas_src>

<mosaic_0001>
module attributes {stable_mosaic.version = 11 : i64} {
  func.func @fused_convblock_kernel(%arg0: i32, %arg1: memref<8x36xbf16, #tpu.memory_space<vmem>>, %arg2: memref<36x512xbf16, #tpu.memory_space<vmem>>, %arg3: memref<8x1xf32, #tpu.memory_space<vmem>>, %arg4: memref<2x8x256xf32, #tpu.memory_space<vmem>>) attributes {dimension_semantics = [#tpu.dimension_semantics<arbitrary>], iteration_bounds = array<i64: 1>, scalar_prefetch = 0 : i64, scratch_operands = 0 : i64, tpu.core_type = #tpu.core_type<tc>, window_params = [{pipeline_mode = #tpu.pipeline_mode<synchronous>, transform_indices = @transform_0, window_bounds = array<i64: 8, 36>}, {pipeline_mode = #tpu.pipeline_mode<synchronous>, transform_indices = @transform_1, window_bounds = array<i64: 36, 512>}, {pipeline_mode = #tpu.pipeline_mode<synchronous>, transform_indices = @transform_2, window_bounds = array<i64: 8, 1>}, {pipeline_mode = #tpu.pipeline_mode<synchronous>, transform_indices = @transform_3, window_bounds = array<i64: 2, 8, 256>}]} {
    %c0 = arith.constant 0 : index
    %c0_0 = arith.constant 0 : index
    %0 = vector.load %arg1[%c0, %c0_0] : memref<8x36xbf16, #tpu.memory_space<vmem>>, vector<8x36xbf16>
    %c0_1 = arith.constant 0 : index
    %c0_2 = arith.constant 0 : index
    %1 = vector.load %arg2[%c0_1, %c0_2] : memref<36x512xbf16, #tpu.memory_space<vmem>>, vector<36x512xbf16>
    %cst = arith.constant dense<0.000000e+00> : vector<8x512xf32>
    %2 = tpu.matmul %0, %1, %cst {dimension_numbers = #tpu.dot_dimension_numbers<[1], [0], [0], [1], [0, 0, 1, 1], [], []>} : vector<8x36xbf16>, vector<36x512xbf16>, vector<8x512xf32> -> vector<8x512xf32>
    %cst_3 = arith.constant dense<0.000000e+00> : vector<8xf32>
    %3 = vector.multi_reduction <add>, %2, %cst_3 [1] : vector<8x512xf32> to vector<8xf32>
    %4 = vector.shape_cast %3 : vector<8xf32> to vector<8x1xf32>
    %cst_4 = arith.constant 5.120000e+02 : f32
    %5 = vector.broadcast %cst_4 : f32 to vector<8x1xf32>
    %6 = arith.divf %4, %5 : vector<8x1xf32>
    %7 = vector.broadcast %6 : vector<8x1xf32> to vector<8x512xf32>
    %8 = arith.subf %2, %7 : vector<8x512xf32>
    %9 = arith.mulf %8, %8 : vector<8x512xf32>
    %cst_5 = arith.constant dense<0.000000e+00> : vector<8xf32>
    %10 = vector.multi_reduction <add>, %9, %cst_5 [1] : vector<8x512xf32> to vector<8xf32>
    %11 = vector.shape_cast %10 : vector<8xf32> to vector<8x1xf32>
    %cst_6 = arith.constant 0.000000e+00 : f32
    %12 = vector.broadcast %cst_6 : f32 to vector<8x1xf32>
    %13 = arith.mulf %12, %6 : vector<8x1xf32>
    %14 = arith.mulf %13, %6 : vector<8x1xf32>
    %15 = arith.subf %11, %14 : vector<8x1xf32>
    %cst_7 = arith.constant 0.000000e+00 : f32
    %16 = vector.broadcast %cst_7 : f32 to vector<8x1xf32>
    %17 = arith.maximumf %15, %16 : vector<8x1xf32>
    %cst_8 = arith.constant 5.120000e+02 : f32
    %18 = vector.broadcast %cst_8 : f32 to vector<8x1xf32>
    %19 = arith.divf %17, %18 : vector<8x1xf32>
    %cst_9 = arith.constant 9.99999974E-6 : f32
    %20 = vector.broadcast %cst_9 : f32 to vector<8x1xf32>
    %21 = arith.addf %19, %20 : vector<8x1xf32>
    %22 = math.rsqrt %21 : vector<8x1xf32>
    %23 = vector.broadcast %22 : vector<8x1xf32> to vector<8x512xf32>
    %24 = arith.mulf %8, %23 : vector<8x512xf32>
    %c0_10 = arith.constant 0 : index
    %c0_11 = arith.constant 0 : index
    %25 = vector.load %arg3[%c0_10, %c0_11] : memref<8x1xf32, #tpu.memory_space<vmem>>, vector<8x1xf32>
    %26 = vector.broadcast %25 : vector<8x1xf32> to vector<8x512xf32>
    %27 = arith.addf %24, %26 : vector<8x512xf32>
    %cst_12 = arith.constant 0.000000e+00 : f32
    %28 = vector.broadcast %cst_12 : f32 to vector<8x512xf32>
    %29 = arith.maximumf %27, %28 : vector<8x512xf32>
    %30 = vector.extract_strided_slice %29 {offsets = [0, 0], sizes = [8, 256], strides = [1, 1]} : vector<8x512xf32> to vector<8x256xf32>
    %c0_13 = arith.constant 0 : index
    %c0_14 = arith.constant 0 : index
    %c0_15 = arith.constant 0 : index
    %31 = vector.load %arg4[%c0_13, %c0_14, %c0_15] : memref<2x8x256xf32, #tpu.memory_space<vmem>>, vector<1x8x256xf32>
    %32 = vector.shape_cast %31 : vector<1x8x256xf32> to vector<8x256xf32>
    %33 = vector.shape_cast %30 : vector<8x256xf32> to vector<1x8x256xf32>
    tpu.vector_store %arg4[%c0_13, %c0_14, %c0_15], %33 {strides = array<i32>} : memref<2x8x256xf32, #tpu.memory_space<vmem>>, vector<1x8x256xf32>,
    %34 = vector.extract_strided_slice %29 {offsets = [0, 256], sizes = [8, 256], strides = [1, 1]} : vector<8x512xf32> to vector<8x256xf32>
    %c1 = arith.constant 1 : index
    %c0_16 = arith.constant 0 : index
    %c0_17 = arith.constant 0 : index
    %35 = vector.load %arg4[%c1, %c0_16, %c0_17] : memref<2x8x256xf32, #tpu.memory_space<vmem>>, vector<1x8x256xf32>
    %36 = vector.shape_cast %35 : vector<1x8x256xf32> to vector<8x256xf32>
    %37 = vector.shape_cast %34 : vector<8x256xf32> to vector<1x8x256xf32>
    tpu.vector_store %arg4[%c1, %c0_16, %c0_17], %37 {strides = array<i32>} : memref<2x8x256xf32, #tpu.memory_space<vmem>>, vector<1x8x256xf32>,
    return
  }
  func.func @transform_0(%arg0: i32) -> (i32, i32) {
    %c0_i32 = arith.constant 0 : i32
    %c0_i32_0 = arith.constant 0 : i32
    %c0_i32_1 = arith.constant 0 : i32
    return %c0_i32, %c0_i32_0 : i32, i32
  }
  func.func @transform_1(%arg0: i32) -> (i32, i32) {
    %c0_i32 = arith.constant 0 : i32
    %c0_i32_0 = arith.constant 0 : i32
    %c0_i32_1 = arith.constant 0 : i32
    return %c0_i32, %c0_i32_0 : i32, i32
  }
  func.func @transform_2(%arg0: i32) -> (i32, i32) {
    %c0_i32 = arith.constant 0 : i32
    %c0_i32_0 = arith.constant 0 : i32
    %c0_i32_1 = arith.constant 0 : i32
    return %c0_i32, %c0_i32_0 : i32, i32
  }
  func.func @transform_3(%arg0: i32) -> (i32, i32, i32) {
    %c0_i32 = arith.constant 0 : i32
    %c0_i32_0 = arith.constant 0 : i32
    %c0_i32_1 = arith.constant 0 : i32
    %c0_i32_2 = arith.constant 0 : i32
    return %c0_i32, %c0_i32_0, %c0_i32_1 : i32, i32, i32
  }
}

</mosaic_0001>

<llo_original>
// kernel: conv_block_forward.1
$region0: #{conv_block_forward.1}
  #allocation0 [shape = 'u32[]', space=smem, size = 0x4, offset = 0x4, fixed_abs, tag = 'smem constant byte address 0x4 - core index']
  #allocation1 [shape = 'u32[144,128]{1,0:T(1,128)}', space=vmem, size = 0x12000, scoped, tag = 'internal scratch']
  %s0 = inlined_call_operand.vmem [shape: bf16[8,36], index: 0, kind: input, shape index: {}]
  %s1 = inlined_call_operand.vmem [shape: bf16[36,512], index: 1, kind: input, shape index: {}]
  %s2 = inlined_call_operand.vmem [shape: f32[8,1], index: 2, kind: input, shape index: {}]
  %s3 = inlined_call_operand.vmem [shape: f32[2,8,256], index: 3, kind: output, shape index: {}]
  %s4 = sld [smem:[#allocation0]]
  $region22: #{conv_block_forward.1} parent=0
    _
  %s6 = ssub.s32 1, %s4
  %s7 = scalar_select 0, %s6, %s4
  // Predicated region
  $region2: #{conv_block_forward.1} parent=0 // pred_check
    _
  $region3: #{conv_block_forward.1} parent=0 // pred_check_branch
    %9 = sbr.rel (0) target = $region5
  $region4: #{conv_block_forward.1} parent=0 // pred_region
    _
  $region5: #{conv_block_forward.1} parent=0 // pred_fallthru
    _
  // Predicated region
  $region6: #{conv_block_forward.1} parent=0 // pred_check
    _
  $region7: #{conv_block_forward.1} parent=0 // pred_check_branch
    %11 = sbr.rel (0) target = $region9
  $region8: #{conv_block_forward.1} parent=0 // pred_region
    _
  $region9: #{conv_block_forward.1} parent=0 // pred_fallthru
    _
  // Predicated region
  $region10: #{conv_block_forward.1} parent=0 // pred_check
    _
  $region11: #{conv_block_forward.1} parent=0 // pred_check_branch
    %13 = sbr.rel (0) target = $region13
  $region12: #{conv_block_forward.1} parent=0 // pred_region
    _
  $region13: #{conv_block_forward.1} parent=0 // pred_fallthru
    _
  %v15 = vld [vmem:[%s0] sm:$0xf]
  %v16 = vld [vmem:[%s1] sm:$0xff]
  %v17 = vld [vmem:[%s1 + $0x8] sm:$0xff]
  %v18 = vld [vmem:[%s1 + $0x10] sm:$0xff]
  %v19 = vld [vmem:[%s1 + $0x18] sm:$0xff]
  %v20 = vld [vmem:[%s1 + $0x20] sm:$0xff]
  %v21 = vld [vmem:[%s1 + $0x28] sm:$0xff]
  %v22 = vld [vmem:[%s1 + $0x30] sm:$0xff]
  %v23 = vld [vmem:[%s1 + $0x38] sm:$0xff]
  %v24 = vld [vmem:[%s1 + $0x40] sm:$0x33]
  %v25 = vld [vmem:[%s1 + $0x48] sm:$0x33]
  %v36 = vunpack.c.l.b16 %v16
  %v37 = vunpack.c.h.b16 %v16
  %v38 = vunpack.c.l.b16 %v17
  %v39 = vunpack.c.h.b16 %v17
  %v40 = vunpack.c.l.b16 %v18
  %v41 = vunpack.c.h.b16 %v18
  %v42 = vunpack.c.l.b16 %v19
  %v43 = vunpack.c.h.b16 %v19
  %v44 = vunpack.c.l.b16 %v20
  %v45 = vunpack.c.h.b16 %v20
  %v46 = vunpack.c.l.b16 %v21
  %v47 = vunpack.c.h.b16 %v21
  %v48 = vunpack.c.l.b16 %v22
  %v49 = vunpack.c.h.b16 %v22
  %v50 = vunpack.c.l.b16 %v23
  %v51 = vunpack.c.h.b16 %v23
  %v52 = vunpack.c.l.b16 %v24
  %v53 = vunpack.c.h.b16 %v24
  %v54 = vunpack.c.l.b16 %v25
  %v55 = vunpack.c.h.b16 %v25
  %v56 = vpack.c.b16 %v40, %v36
  %v57 = vpack.c.b16 %v41, %v37
  %v58 = vpack.c.b16 %v42, %v38
  %v59 = vpack.c.b16 %v43, %v39
  %v60 = vpack.c.b16 %v48, %v44
  %v61 = vpack.c.b16 %v49, %v45
  %v62 = vpack.c.b16 %v50, %v46
  %v63 = vpack.c.b16 %v51, %v47
  %v64 = vpack.c.b16 %v52, %v52
  %v65 = vpack.c.b16 %v53, %v53
  %v66 = vpack.c.b16 %v54, %v54
  %v67 = vpack.c.b16 %v55, %v55
  %vm76 = vcmask 293888
  %v78 = vsel %vm76, %v15, 0
  %vm80 = vcmask 1041408
  %v82 = vsel %vm80, %v64, 0
  %v85 = vsel %vm80, %v65, 0
  %v88 = vsel %vm80, %v66, 0
  %v91 = vsel %vm80, %v67, 0
  %93 = vmatprep.subr.bf16.mxu0 0
  %94 = vmatpush1.bf16.msra.mxu0 0
  %95 = vmatprep.subr.bf16.mxu0 0
  %96 = vmatpush1.bf16.msra.mxu0 0
  %97 = vmatprep.subr.bf16.mxu0 0
  %98 = vmatpush1.bf16.msra.mxu0 0
  %99 = vmatprep.subr.bf16.mxu0 0
  %100 = vmatpush1.bf16.msra.mxu0 0
  %101 = vmatprep.subr.bf16.mxu0 0
  %102 = vmatpush1.bf16.msra.mxu0 0
  %103 = vmatprep.subr.bf16.mxu0 %v85
  %104 = vmatpush1.bf16.msra.mxu0 %v82
  %105 = vmatprep.subr.bf16.mxu0 %v61
  %106 = vmatpush1.bf16.msra.mxu0 %v60
  %107 = vmatprep.subr.bf16.mxu0 %v57
  %108 = vmatpush1.bf16.msra.mxu0 %v56
  %109 = vmatprep.subr.bf16.mxu0 0
  %110 = vmatpush2.bf16.msra.mxu0 0
  %111 = vmatprep.subr.bf16.mxu0 0
  %112 = vmatpush2.bf16.msra.mxu0 0
  %113 = vmatprep.subr.bf16.mxu0 0
  %114 = vmatpush2.bf16.msra.mxu0 0
  %115 = vmatprep.subr.bf16.mxu0 0
  %116 = vmatpush2.bf16.msra.mxu0 0
  %117 = vmatprep.subr.bf16.mxu0 0
  %118 = vmatpush2.bf16.msra.mxu0 0
  %119 = vmatprep.subr.bf16.mxu0 0
  %120 = vmatpush2.bf16.msra.mxu0 0
  %121 = vmatprep.subr.bf16.mxu0 0
  %122 = vmatpush2.bf16.msra.mxu0 0
  %123 = vmatprep.subr.bf16.mxu0 0
  %124 = vmatpush2.bf16.msra.mxu0 0
  %125 = vmatprep.mubr.bf16.mxu0 0
  %126 = vmatmul.mubr.bf16.gmra.mxu0 %v78
  %v127 = vpop.f32.mrf.mxu0
  %v128 = vadd.f32 0.0, %v127
  %v129 = vpop.f32.mrf.mxu0
  %v130 = vadd.f32 0.0, %v129
  %v131 = vpop.f32.mrf.mxu0
  %v132 = vpop.f32.mrf.mxu0
  %133 = vdwg.mxu0
  %134 = vmatprep.subr.bf16.mxu0 0
  %135 = vmatpush1.bf16.msra.mxu0 0
  %136 = vmatprep.subr.bf16.mxu0 0
  %137 = vmatpush1.bf16.msra.mxu0 0
  %138 = vmatprep.subr.bf16.mxu0 0
  %139 = vmatpush1.bf16.msra.mxu0 0
  %140 = vmatprep.subr.bf16.mxu0 0
  %141 = vmatpush1.bf16.msra.mxu0 0
  %142 = vmatprep.subr.bf16.mxu0 0
  %143 = vmatpush1.bf16.msra.mxu0 0
  %144 = vmatprep.subr.bf16.mxu0 %v91
  %145 = vmatpush1.bf16.msra.mxu0 %v88
  %146 = vmatprep.subr.bf16.mxu0 %v63
  %147 = vmatpush1.bf16.msra.mxu0 %v62
  %148 = vmatprep.subr.bf16.mxu0 %v59
  %149 = vmatpush1.bf16.msra.mxu0 %v58
  %150 = vmatprep.subr.bf16.mxu0 0
  %151 = vmatpush2.bf16.msra.mxu0 0
  %152 = vmatprep.subr.bf16.mxu0 0
  %153 = vmatpush2.bf16.msra.mxu0 0
  %154 = vmatprep.subr.bf16.mxu0 0
  %155 = vmatpush2.bf16.msra.mxu0 0
  %156 = vmatprep.subr.bf16.mxu0 0
  %157 = vmatpush2.bf16.msra.mxu0 0
  %158 = vmatprep.subr.bf16.mxu0 0
  %159 = vmatpush2.bf16.msra.mxu0 0
  %160 = vmatprep.subr.bf16.mxu0 0
  %161 = vmatpush2.bf16.msra.mxu0 0
  %162 = vmatprep.subr.bf16.mxu0 0
  %163 = vmatpush2.bf16.msra.mxu0 0
  %164 = vmatprep.subr.bf16.mxu0 0
  %165 = vmatpush2.bf16.msra.mxu0 0
  %166 = vmatprep.mubr.bf16.mxu0 0
  %167 = vmatmul.mubr.bf16.gmra.mxu0 %v78
  %v168 = vpop.f32.mrf.mxu0
  %v169 = vadd.f32 0.0, %v168
  %v170 = vpop.f32.mrf.mxu0
  %v171 = vadd.f32 0.0, %v170
  %v172 = vpop.f32.mrf.mxu0
  %v173 = vpop.f32.mrf.mxu0
  %174 = vdwg.mxu0
  %v175 = vadd.f32 %v128, %v130
  %v176 = vadd.f32 %v175, %v169
  %v177 = vadd.f32 %v176, %v171
  %178 = vadd.xlane.f32.xlu0 %v177
  %v179 = vpop.xlane.xlu0 %178
  %v180 = vrcp.pop 512.0
  %v181 = vmul.f32 %v179, %v180
  %v182 = vsub.f32 %v128, %v181
  %v183 = vsub.f32 %v130, %v181
  %v184 = vsub.f32 %v169, %v181
  %v185 = vsub.f32 %v171, %v181
  %v186 = vmul.f32 %v182, %v182
  %v187 = vmul.f32 %v183, %v183
  %v188 = vmul.f32 %v184, %v184
  %v189 = vmul.f32 %v185, %v185
  %v190 = vadd.f32 %v186, %v187
  %v191 = vadd.f32 %v190, %v188
  %v192 = vadd.f32 %v191, %v189
  %193 = vadd.xlane.f32.xlu0 %v192
  %v194 = vpop.xlane.xlu0 %193
  %v195 = vmul.f32 %v181, 0.0
  %v196 = vmul.f32 %v195, %v181
  %v197 = vsub.f32 %v194, %v196
  %v198 = vmax.f32 %v197, 0.0
  %v199 = vmul.f32 %v198, %v180
  %v200 = vadd.f32 %v199, 1e-05
  %v201 = vrsqrt.pop %v200
  %v202 = vmul.f32 %v182, %v201
  %v203 = vmul.f32 %v183, %v201
  %v204 = vmul.f32 %v184, %v201
  %v205 = vmul.f32 %v185, %v201
  %v206 = vld [vmem:[%s2] sm:$0xff]
  %208 = vset.pattern.permute.xlu0 0
  %209 = vperm.xlu0 %208, %v206
  %v210 = vpop.permute.xlu0 %209
  %v212 = vadd.f32 %v202, %v210
  %v213 = vadd.f32 %v203, %v210
  %v214 = vadd.f32 %v204, %v210
  %v215 = vadd.f32 %v205, %v210
  %v216 = vmax.f32 %v212, 0.0
  %v217 = vmax.f32 %v213, 0.0
  %v218 = vmax.f32 %v214, 0.0
  %v219 = vmax.f32 %v215, 0.0
  %220 = vst [vmem:[%s3] sm:$0xff] %v216
  %221 = vst [vmem:[%s3 + $0x8] sm:$0xff] %v217
  %s222 = scalar_lea.vmem %s3, 16
  %223 = vst [vmem:[%s222] sm:$0xff] %v218
  %224 = vst [vmem:[%s222 + $0x8] sm:$0xff] %v219
  // Predicated region
  $region14: #{conv_block_forward.1} parent=0 // pred_check
    _
  $region15: #{conv_block_forward.1} parent=0 // pred_check_branch
    %226 = sbr.rel (0) target = $region17
  $region16: #{conv_block_forward.1} parent=0 // pred_region
    _
  $region17: #{conv_block_forward.1} parent=0 // pred_fallthru
    _
  // Predicated region
  $region18: #{conv_block_forward.1} parent=0 // pred_check
    _
  $region19: #{conv_block_forward.1} parent=0 // pred_check_branch
    %228 = sbr.rel (0) target = $region21
  $region20: #{conv_block_forward.1} parent=0 // pred_region
    _
  $region21: #{conv_block_forward.1} parent=0 // pred_fallthru
    _

</llo_original>
